<compile_context>
chip_gen: v7x
topology: tpu7x:2x2x1
jax: 0.10.0
libtpu: 0.0.40
codegen_flags: <defaults>
</compile_context>

<pallas_src>
import functools

import jax
import jax.numpy as jnp
from jax.experimental import pallas as pl
from jax.experimental.pallas import tpu as pltpu

_LANE = 128
_COMPUTE_DTYPE = jnp.bfloat16
_FAST_PATH_BYTES = 8 * 1024 * 1024


def _round_up(x, m):
    return ((x + m - 1) // m) * m


def _cdiv(a, b):
    return -(-a // b)


def _pad2d(a, rows, cols, dtype):
    r, c = a.shape
    return jnp.pad(a.astype(jnp.float32),
                   ((0, rows - r), (0, cols - c))).astype(dtype)


def _vmem_limit():
    """Per-generation VMEM limit: physical capacity minus headroom, <= 64 MiB."""
    try:
        cap = pltpu.get_tpu_info().vmem_capacity_bytes
        return max(32 * 1024 * 1024, min(cap - 16 * 1024 * 1024, 64 * 1024 * 1024))
    except Exception:
        return None  # fall back to compiler default


def _masked_log_softmax(z, num_valid_cols):
    """log_softmax over the first num_valid_cols lanes of an f32 block."""
    col = jax.lax.broadcasted_iota(jnp.int32, z.shape, 1)
    valid = col < num_valid_cols
    zm = jnp.where(valid, z, -jnp.inf)
    m = jnp.max(zm, axis=-1, keepdims=True)
    zs = zm - m
    lse = jnp.log(jnp.sum(jnp.where(valid, jnp.exp(zs), 0.0),
                          axis=-1, keepdims=True))
    return zs - lse


# --------------------------- kernels ---------------------------------------

def _xw_kernel(x_ref, w_ref, o_ref):
    # o[i] = X[i_block] @ W ; W is VMEM-resident (constant index_map).
    o_ref[...] = jnp.dot(x_ref[...], w_ref[...],
                         preferred_element_type=jnp.float32).astype(o_ref.dtype)


def _prop_relu_w2_kernel(a_ref, xw_ref, b1_ref, w2_ref, o_ref, acc_ref, *, tk):
    # acc[i] += A_hat[i, k] @ XW[k] (XW is VMEM-resident; slice by k in-kernel).
    # Finalize: fuse bias + ReLU + the layer-2 feature transform (@ W2).
    k = pl.program_id(1)

    @pl.when(k == 0)
    def _():
        acc_ref[...] = jnp.zeros_like(acc_ref)

    start = pl.multiple_of(k * tk, _LANE)
    acc_ref[...] += jnp.dot(a_ref[...], xw_ref[pl.ds(start, tk), :],
                            preferred_element_type=jnp.float32)

    @pl.when(k == pl.num_programs(1) - 1)
    def _():
        h = jnp.maximum(acc_ref[...] + b1_ref[...], 0.0)
        # TODO(synk): F.dropout(p=0.5) is identity in eval mode (training=False).
        o_ref[...] = jnp.dot(h.astype(w2_ref.dtype), w2_ref[...],
                             preferred_element_type=jnp.float32).astype(o_ref.dtype)


def _prop_log_softmax_kernel(a_ref, xw_ref, b2_ref, o_ref, acc_ref, *,
                             tk, num_valid_cols):
    # acc[i] += A_hat[i, k] @ XW2[k]; finalize with bias + masked log_softmax.
    k = pl.program_id(1)

    @pl.when(k == 0)
    def _():
        acc_ref[...] = jnp.zeros_like(acc_ref)

    start = pl.multiple_of(k * tk, _LANE)
    acc_ref[...] += jnp.dot(a_ref[...], xw_ref[pl.ds(start, tk), :],
                            preferred_element_type=jnp.float32)

    @pl.when(k == pl.num_programs(1) - 1)
    def _():
        o_ref[...] = _masked_log_softmax(acc_ref[...] + b2_ref[...],
                                         num_valid_cols)


def _fused_small_kernel(x_ref, a_ref, w1_ref, b1_ref, w2_ref, b2_ref, o_ref, *,
                        num_valid_cols):
    # Whole forward in one kernel (everything VMEM-resident), for small graphs.
    cdt = a_ref.dtype
    a = a_ref[...]
    xw1 = jnp.dot(x_ref[...], w1_ref[...], preferred_element_type=jnp.float32)
    h1 = jnp.maximum(
        jnp.dot(a, xw1.astype(cdt), preferred_element_type=jnp.float32)
        + b1_ref[...], 0.0)
    # TODO(synk): F.dropout(p=0.5) is identity in eval mode (training=False).
    xw2 = jnp.dot(h1.astype(cdt), w2_ref[...], preferred_element_type=jnp.float32)
    z = jnp.dot(a, xw2.astype(cdt), preferred_element_type=jnp.float32) + b2_ref[...]
    o_ref[...] = _masked_log_softmax(z, num_valid_cols)


# --------------------------- pallas_call wrappers ---------------------------

def _feature_transform(x_p, w_p, *, tm):
    n_p, f_p = x_p.shape
    f_out = w_p.shape[1]
    return pl.pallas_call(
        _xw_kernel,
        out_shape=jax.ShapeDtypeStruct((n_p, f_out), _COMPUTE_DTYPE),
        grid=(n_p // tm,),
        in_specs=[
            pl.BlockSpec((tm, f_p), lambda i: (i, 0)),     # node-block of X
            pl.BlockSpec((f_p, f_out), lambda i: (0, 0)),  # W VMEM-resident
        ],
        out_specs=pl.BlockSpec((tm, f_out), lambda i: (i, 0)),
        compiler_params=pltpu.CompilerParams(
            dimension_semantics=("parallel",),
            vmem_limit_bytes=_vmem_limit()),
    )(x_p, w_p)


def _propagate_relu_w2(a_p, xw_p, b1_p, w2_p, *, tm, tk):
    n_p = a_p.shape[0]
    h_p = xw_p.shape[1]
    c_p = w2_p.shape[1]
    kernel = functools.partial(_prop_relu_w2_kernel, tk=tk)
    return pl.pallas_call(
        kernel,
        out_shape=jax.ShapeDtypeStruct((n_p, c_p), _COMPUTE_DTYPE),
        grid=(n_p // tm, n_p // tk),
        in_specs=[
            pl.BlockSpec((tm, tk), lambda i, k: (i, k),
                         pipeline_mode=pl.Buffered(3)),      # A_hat tile, 3-deep
            pl.BlockSpec((n_p, h_p), lambda i, k: (0, 0)),   # XW VMEM-resident
            pl.BlockSpec((1, h_p), lambda i, k: (0, 0)),     # b1 resident
            pl.BlockSpec((h_p, c_p), lambda i, k: (0, 0)),   # W2 resident
        ],
        out_specs=pl.BlockSpec((tm, c_p), lambda i, k: (i, 0)),
        scratch_shapes=[pltpu.VMEM((tm, h_p), jnp.float32)],
        compiler_params=pltpu.CompilerParams(
            dimension_semantics=("parallel", "arbitrary"),
            vmem_limit_bytes=_vmem_limit()),
    )(a_p, xw_p, b1_p, w2_p)


def _propagate_log_softmax(a_p, xw_p, b2_p, *, tm, tk, num_valid_cols):
    n_p = a_p.shape[0]
    c_p = xw_p.shape[1]
    kernel = functools.partial(_prop_log_softmax_kernel, tk=tk,
                               num_valid_cols=num_valid_cols)
    return pl.pallas_call(
        kernel,
        out_shape=jax.ShapeDtypeStruct((n_p, c_p), jnp.float32),
        grid=(n_p // tm, n_p // tk),
        in_specs=[
            pl.BlockSpec((tm, tk), lambda i, k: (i, k),
                         pipeline_mode=pl.Buffered(3)),      # A_hat tile, 3-deep
            pl.BlockSpec((n_p, c_p), lambda i, k: (0, 0)),   # XW2 VMEM-resident
            pl.BlockSpec((1, c_p), lambda i, k: (0, 0)),     # b2 resident
        ],
        out_specs=pl.BlockSpec((tm, c_p), lambda i, k: (i, 0)),
        scratch_shapes=[pltpu.VMEM((tm, c_p), jnp.float32)],
        compiler_params=pltpu.CompilerParams(
            dimension_semantics=("parallel", "arbitrary"),
            vmem_limit_bytes=_vmem_limit()),
    )(a_p, xw_p, b2_p)


def _forward_fused_small(x_p, a_p, w1_p, b1_p, w2_p, b2_p, num_class):
    n_p = a_p.shape[0]
    c_p = w2_p.shape[1]
    kernel = functools.partial(_fused_small_kernel, num_valid_cols=num_class)
    vmem_full = lambda: pl.BlockSpec(memory_space=pltpu.MemorySpace.VMEM)
    return pl.pallas_call(
        kernel,
        out_shape=jax.ShapeDtypeStruct((n_p, c_p), jnp.float32),
        in_specs=[vmem_full() for _ in range(6)],
        out_specs=vmem_full(),
        compiler_params=pltpu.CompilerParams(vmem_limit_bytes=_vmem_limit()),
    )(x_p, a_p, w1_p, b1_p, w2_p, b2_p)


# --------------------------- model glue -------------------------------------

def build_normalized_adjacency(edge_index, num_nodes, edge_weight=None):
    """Dense D^-1/2 (A + I) D^-1/2; built ONCE per graph, outside forward."""
    src, dst = edge_index[0], edge_index[1]
    if edge_weight is None:
        edge_weight = jnp.ones(src.shape, jnp.float32)
    A = jnp.zeros((num_nodes, num_nodes), jnp.float32).at[dst, src].add(edge_weight)
    A = A + jnp.eye(num_nodes, dtype=jnp.float32)
    deg = jnp.sum(A, axis=1)
    dinv = jnp.where(deg > 0, jax.lax.rsqrt(deg), 0.0)
    return A * dinv[:, None] * dinv[None, :]


def gcn_simple_forward(x, a_hat, params, *, block_nodes=512, use_fast_path=None):
    """x: [N, F] node features, a_hat: [N, N] precomputed normalized adjacency."""
    N, F = x.shape
    H = params["w1"].shape[1]
    C = params["w2"].shape[1]

    Fp = _round_up(F, _LANE)
    Hp = _round_up(H, _LANE)
    Cp = _round_up(C, _LANE)
    np_min = _round_up(N, _LANE)

    if use_fast_path is None:
        footprint = 2 * (np_min * np_min + np_min * (Fp + Hp + Cp))
        use_fast_path = footprint <= _FAST_PATH_BYTES

    if use_fast_path:
        Np = np_min
        x_p = _pad2d(x, Np, Fp, _COMPUTE_DTYPE)
        a_p = _pad2d(a_hat, Np, Np, _COMPUTE_DTYPE)
        w1_p = _pad2d(params["w1"], Fp, Hp, _COMPUTE_DTYPE)
        b1_p = _pad2d(params["b1"], 1, Hp, jnp.float32)
        w2_p = _pad2d(params["w2"], Hp, Cp, _COMPUTE_DTYPE)
        b2_p = _pad2d(params["b2"], 1, Cp, jnp.float32)
        out_p = _forward_fused_small(x_p, a_p, w1_p, b1_p, w2_p, b2_p, C)
        return out_p[:N, :C]

    # ---- tiled path ----
    bn = _round_up(max(block_nodes, _LANE), _LANE)   # defensive 128 rounding
    nb = max(1, _cdiv(np_min, bn))
    if np_min >= 2 * _LANE:
        nb = max(nb, 2)                              # >=2 node blocks for v7x's 2 TCs
    tm = _round_up(_cdiv(np_min, nb), _LANE)
    tk = tm
    Np = nb * tm

    x_p = _pad2d(x, Np, Fp, _COMPUTE_DTYPE)
    a_p = _pad2d(a_hat, Np, Np, _COMPUTE_DTYPE)
    w1_p = _pad2d(params["w1"], Fp, Hp, _COMPUTE_DTYPE)
    b1_p = _pad2d(params["b1"], 1, Hp, jnp.float32)
    w2_p = _pad2d(params["w2"], Hp, Cp, _COMPUTE_DTYPE)
    b2_p = _pad2d(params["b2"], 1, Cp, jnp.float32)

    # conv1 feature transform: XW1
    xw1 = _feature_transform(x_p, w1_p, tm=tm)                       # (Np, Hp) bf16
    # conv1 propagate + bias + ReLU, fused with conv2 feature transform (@ W2)
    xw2 = _propagate_relu_w2(a_p, xw1, b1_p, w2_p, tm=tm, tk=tk)     # (Np, Cp) bf16
    # conv2 propagate + bias, then masked log_softmax over the C real classes
    out_p = _propagate_log_softmax(a_p, xw2, b2_p, tm=tm, tk=tk,
                                   num_valid_cols=C)                 # (Np, Cp) f32
    return out_p[:N, :C]


def init_params(key, num_node_features, hidden, num_class):
    """Glorot-uniform weights (stored [in, out]) + zero bias (GCNConv style)."""
    k1, k2 = jax.random.split(key)

    def glorot(k, fan_in, fan_out):
        bound = jnp.sqrt(6.0 / (fan_in + fan_out)).astype(jnp.float32)
        return jax.random.uniform(k, (fan_in, fan_out), jnp.float32, -bound, bound)

    return dict(
        w1=glorot(k1, num_node_features, hidden),
        b1=jnp.zeros((1, hidden), jnp.float32),
        w2=glorot(k2, hidden, num_class),
        b2=jnp.zeros((1, num_class), jnp.float32),
    )


def _reference_forward(x, a_hat, params):
    h = jnp.maximum(a_hat @ (x @ params["w1"]) + params["b1"], 0.0)
    z = a_hat @ (h @ params["w2"]) + params["b2"]
    return jax.nn.log_softmax(z, axis=-1)


def _ring_graph(n):
    fwd = jnp.arange(n, dtype=jnp.int32)
    bwd = (fwd + 1) % n
    return jnp.stack(
        [jnp.concatenate([fwd, bwd]), jnp.concatenate([bwd, fwd])], axis=0)


if __name__ == "__main__":
    F = 32    # num_node_features
    H = 16    # hidden (module default)
    C = 7     # num_class

    key = jax.random.PRNGKey(0)
    kx1, kx2, kp = jax.random.split(key, 3)
    params = init_params(kp, F, H, C)

    # --- small graph: exercises the fused single-call fast path ---
    N1 = 8
    x1 = jax.random.normal(kx1, (N1, F), jnp.float32)
    a1 = build_normalized_adjacency(_ring_graph(N1), N1)   # once per graph
    out1 = gcn_simple_forward(x1, a1, params)

    # --- larger graph, forced onto the tiled multi-block path ---
    N2 = 300
    x2 = jax.random.normal(kx2, (N2, F), jnp.float32)
    a2 = build_normalized_adjacency(_ring_graph(N2), N2)
    out2 = gcn_simple_forward(x2, a2, params, use_fast_path=False)

    out1, out2 = jax.block_until_ready((out1, out2))

    for out, x, a, n in ((out1, x1, a1, N1), (out2, x2, a2, N2)):
        assert out.shape == (n, C)
        assert bool(jnp.all(jnp.isfinite(out)))
        # log_softmax rows exponentiate-sum to 1 (computed in f32 -> tight)
        assert bool(jnp.all(jnp.abs(jnp.sum(jnp.exp(out), axis=-1) - 1.0) < 1e-3))
        # matches the pure-JAX f32 reference up to bf16 storage drift
        ref = _reference_forward(x, a, params)
        assert bool(jnp.max(jnp.abs(out - ref)) < 0.1)

    print("KERNEL_OK")
</pallas_src>

<mosaic_0001>
module attributes {stable_mosaic.version = 11 : i64} {
  func.func @_fused_small_kernel(%arg0: memref<128x128xbf16, #tpu.memory_space<vmem>>, %arg1: memref<128x128xbf16, #tpu.memory_space<vmem>>, %arg2: memref<128x128xbf16, #tpu.memory_space<vmem>>, %arg3: memref<1x128xf32, #tpu.memory_space<vmem>>, %arg4: memref<128x128xbf16, #tpu.memory_space<vmem>>, %arg5: memref<1x128xf32, #tpu.memory_space<vmem>>, %arg6: memref<128x128xf32, #tpu.memory_space<vmem>>) attributes {dimension_semantics = [], scalar_prefetch = 0 : i64, scratch_operands = 0 : i64, tpu.core_type = #tpu.core_type<tc>} {
    %c0 = arith.constant 0 : index
    %c0_0 = arith.constant 0 : index
    %0 = vector.load %arg1[%c0, %c0_0] : memref<128x128xbf16, #tpu.memory_space<vmem>>, vector<128x128xbf16>
    %c0_1 = arith.constant 0 : index
    %c0_2 = arith.constant 0 : index
    %1 = vector.load %arg0[%c0_1, %c0_2] : memref<128x128xbf16, #tpu.memory_space<vmem>>, vector<128x128xbf16>
    %c0_3 = arith.constant 0 : index
    %c0_4 = arith.constant 0 : index
    %2 = vector.load %arg2[%c0_3, %c0_4] : memref<128x128xbf16, #tpu.memory_space<vmem>>, vector<128x128xbf16>
    %cst = arith.constant dense<0.000000e+00> : vector<128x128xf32>
    %3 = tpu.matmul %1, %2, %cst {dimension_numbers = #tpu.dot_dimension_numbers<[1], [0], [0], [1], [0, 0, 1, 1], [], []>} : vector<128x128xbf16>, vector<128x128xbf16>, vector<128x128xf32> -> vector<128x128xf32>
    %4 = arith.truncf %3 : vector<128x128xf32> to vector<128x128xbf16>
    %cst_5 = arith.constant dense<0.000000e+00> : vector<128x128xf32>
    %5 = tpu.matmul %0, %4, %cst_5 {dimension_numbers = #tpu.dot_dimension_numbers<[1], [0], [0], [1], [0, 0, 1, 1], [], []>} : vector<128x128xbf16>, vector<128x128xbf16>, vector<128x128xf32> -> vector<128x128xf32>
    %c0_6 = arith.constant 0 : index
    %c0_7 = arith.constant 0 : index
    %6 = vector.load %arg3[%c0_6, %c0_7] : memref<1x128xf32, #tpu.memory_space<vmem>>, vector<1x128xf32>
    %7 = vector.broadcast %6 : vector<1x128xf32> to vector<128x128xf32>
    %8 = arith.addf %5, %7 : vector<128x128xf32>
    %cst_8 = arith.constant 0.000000e+00 : f32
    %9 = vector.broadcast %cst_8 : f32 to vector<128x128xf32>
    %10 = arith.maximumf %8, %9 : vector<128x128xf32>
    %11 = arith.truncf %10 : vector<128x128xf32> to vector<128x128xbf16>
    %c0_9 = arith.constant 0 : index
    %c0_10 = arith.constant 0 : index
    %12 = vector.load %arg4[%c0_9, %c0_10] : memref<128x128xbf16, #tpu.memory_space<vmem>>, vector<128x128xbf16>
    %cst_11 = arith.constant dense<0.000000e+00> : vector<128x128xf32>
    %13 = tpu.matmul %11, %12, %cst_11 {dimension_numbers = #tpu.dot_dimension_numbers<[1], [0], [0], [1], [0, 0, 1, 1], [], []>} : vector<128x128xbf16>, vector<128x128xbf16>, vector<128x128xf32> -> vector<128x128xf32>
    %14 = arith.truncf %13 : vector<128x128xf32> to vector<128x128xbf16>
    %cst_12 = arith.constant dense<0.000000e+00> : vector<128x128xf32>
    %15 = tpu.matmul %0, %14, %cst_12 {dimension_numbers = #tpu.dot_dimension_numbers<[1], [0], [0], [1], [0, 0, 1, 1], [], []>} : vector<128x128xbf16>, vector<128x128xbf16>, vector<128x128xf32> -> vector<128x128xf32>
    %c0_13 = arith.constant 0 : index
    %c0_14 = arith.constant 0 : index
    %16 = vector.load %arg5[%c0_13, %c0_14] : memref<1x128xf32, #tpu.memory_space<vmem>>, vector<1x128xf32>
    %17 = vector.broadcast %16 : vector<1x128xf32> to vector<128x128xf32>
    %18 = arith.addf %15, %17 : vector<128x128xf32>
    %19 = tpu.iota {dimensions = array<i32: 1>} : vector<128x128xi32>
    %c7_i32 = arith.constant 7 : i32
    %20 = vector.broadcast %c7_i32 : i32 to vector<128x128xi32>
    %21 = arith.cmpi slt, %19, %20 : vector<128x128xi32>
    %cst_15 = arith.constant 0xFF800000 : f32
    %22 = vector.broadcast %cst_15 : f32 to vector<128x128xf32>
    %23 = arith.select %21, %18, %22 : vector<128x128xi1>, vector<128x128xf32>
    %cst_16 = arith.constant dense<0xFF800000> : vector<128xf32>
    %24 = vector.multi_reduction <maximumf>, %23, %cst_16 [1] : vector<128x128xf32> to vector<128xf32>
    %25 = vector.shape_cast %24 : vector<128xf32> to vector<128x1xf32>
    %26 = vector.broadcast %25 : vector<128x1xf32> to vector<128x128xf32>
    %27 = arith.subf %23, %26 : vector<128x128xf32>
    %28 = math.exp %27 : vector<128x128xf32>
    %cst_17 = arith.constant 0.000000e+00 : f32
    %29 = vector.broadcast %cst_17 : f32 to vector<128x128xf32>
    %30 = arith.select %21, %28, %29 : vector<128x128xi1>, vector<128x128xf32>
    %cst_18 = arith.constant dense<0.000000e+00> : vector<128xf32>
    %31 = vector.multi_reduction <add>, %30, %cst_18 [1] : vector<128x128xf32> to vector<128xf32>
    %32 = vector.shape_cast %31 : vector<128xf32> to vector<128x1xf32>
    %33 = math.log %32 : vector<128x1xf32>
    %34 = vector.broadcast %33 : vector<128x1xf32> to vector<128x128xf32>
    %35 = arith.subf %27, %34 : vector<128x128xf32>
    %c0_19 = arith.constant 0 : index
    %c0_20 = arith.constant 0 : index
    %36 = vector.load %arg6[%c0_19, %c0_20] : memref<128x128xf32, #tpu.memory_space<vmem>>, vector<128x128xf32>
    tpu.vector_store %arg6[%c0_19, %c0_20], %35 {strides = array<i32>} : memref<128x128xf32, #tpu.memory_space<vmem>>, vector<128x128xf32>,
    return
  }
}

</mosaic_0001>

<llo_original>
// kernel: tpu_custom_call.1
$region0: #{tpu_custom_call.1}
  #allocation0 [shape = 'u32[]', space=smem, size = 0x4, offset = 0x4, fixed_abs, tag = 'smem constant byte address 0x4 - core index']
  #allocation1 [shape = 'u32[144,128]{1,0:T(1,128)}', space=vmem, size = 0x12000, scoped, tag = 'internal scratch']
  %s0 = inlined_call_operand.hbm [shape: bf16[128,128], index: 0, kind: input, shape index: {}]
  %s1 = inlined_call_operand.hbm [shape: bf16[128,128], index: 1, kind: input, shape index: {}]
  %s2 = inlined_call_operand.hbm [shape: bf16[128,128], index: 2, kind: input, shape index: {}]
  %s3 = inlined_call_operand.vmem [shape: f32[1,128], index: 3, kind: input, shape index: {}]
  %s4 = inlined_call_operand.hbm [shape: bf16[128,128], index: 4, kind: input, shape index: {}]
  %s5 = inlined_call_operand.vmem [shape: f32[1,128], index: 5, kind: input, shape index: {}]
  %s6 = inlined_call_operand.hbm [shape: f32[128,128], index: 6, kind: output, shape index: {}]
  %s7 = sld [smem:[#allocation0]]
  $region50: #{tpu_custom_call.1} parent=0
    _
  %s9 = ssub.s32 1, %s7
  %s10 = scalar_select 0, %s9, %s7
  $region1: #{tpu_custom_call.1} parent=0
    #allocation2 [shape = 'u8[32768]{0}', space=vmem, size = 0x8000, scoped, tag = 'input window, operand 0, single buffered']
    #allocation3 [shape = 's32[1]{0}', space=sflag, size = 0x4, scoped, tag = 'scoped memory for tpu_custom_call.1']
    #allocation4 [shape = 's32[1]{0}', space=sflag, size = 0x4, scoped, tag = 'scoped memory for tpu_custom_call.1']
    #allocation5 [shape = 'u8[32768]{0}', space=vmem, size = 0x8000, scoped, tag = 'input window, operand 1, single buffered']
    #allocation6 [shape = 's32[1]{0}', space=sflag, size = 0x4, scoped, tag = 'scoped memory for tpu_custom_call.1']
    #allocation7 [shape = 'u8[32768]{0}', space=vmem, size = 0x8000, scoped, tag = 'input window, operand 2, single buffered']
    #allocation8 [shape = 'u8[32768]{0}', space=vmem, size = 0x8000, scoped, tag = 'input window, operand 4, single buffered']
    #allocation9 [shape = 's32[1]{0}', space=sflag, size = 0x4, scoped, tag = 'scoped memory for tpu_custom_call.1']
    #allocation10 [shape = 'u8[65536]{0}', space=vmem, size = 0x10000, scoped, tag = 'output window, operand 0, single buffered']
    %11 = vsyncpa [#allocation3], 0
    %12 = vsyncpa [#allocation6], 0
    %13 = vsyncpa [#allocation9], 0
    %14 = vsyncpa [#allocation4], 0
    // Predicated region
    $region2: #{tpu_custom_call.1} parent=1 // pred_check
      _
    $region3: #{tpu_custom_call.1} parent=1 // pred_check_branch
      %16 = sbr.rel (0) target = $region5
    $region4: #{tpu_custom_call.1} parent=1 // pred_region
      %s18 = ssub.s32 1024, 1024
      %19 = vsyncadd [#allocation3], %s18
      %s20 = sshll.u32 [#allocation2], 4
      %s21 = int_to_ptr.vmem [resolvable:$true] %s20
      %26 = dma.hbm_to_vmem [thread:$0]  %s0, 1024, %s21, [#allocation3], 64, 64, 4
    $region5: #{tpu_custom_call.1} parent=1 // pred_fallthru
      _
    // Predicated region
    $region6: #{tpu_custom_call.1} parent=1 // pred_check
      _
    $region7: #{tpu_custom_call.1} parent=1 // pred_check_branch
      %28 = sbr.rel (0) target = $region9
    $region8: #{tpu_custom_call.1} parent=1 // pred_region
      %s30 = ssub.s32 1024, 1024
      %31 = vsyncadd [#allocation6], %s30
      %s32 = sshll.u32 [#allocation5], 4
      %s33 = int_to_ptr.vmem [resolvable:$true] %s32
      %38 = dma.hbm_to_vmem [thread:$0]  %s1, 1024, %s33, [#allocation6], 64, 64, 4
    $region9: #{tpu_custom_call.1} parent=1 // pred_fallthru
      _
    // Predicated region
    $region10: #{tpu_custom_call.1} parent=1 // pred_check
      _
    $region11: #{tpu_custom_call.1} parent=1 // pred_check_branch
      %40 = sbr.rel (0) target = $region13
    $region12: #{tpu_custom_call.1} parent=1 // pred_region
      %s42 = ssub.s32 1024, 1024
      %43 = vsyncadd [#allocation6], %s42
      %s44 = sshll.u32 [#allocation7], 4
      %s45 = int_to_ptr.vmem [resolvable:$true] %s44
      %50 = dma.hbm_to_vmem [thread:$0]  %s2, 1024, %s45, [#allocation6], 64, 64, 4
    $region13: #{tpu_custom_call.1} parent=1 // pred_fallthru
      _
    // Predicated region
    $region14: #{tpu_custom_call.1} parent=1 // pred_check
      _
    $region15: #{tpu_custom_call.1} parent=1 // pred_check_branch
      %52 = sbr.rel (0) target = $region17
    $region16: #{tpu_custom_call.1} parent=1 // pred_region
      _
    $region17: #{tpu_custom_call.1} parent=1 // pred_fallthru
      _
    // Predicated region
    $region18: #{tpu_custom_call.1} parent=1 // pred_check
      _
    $region19: #{tpu_custom_call.1} parent=1 // pred_check_branch
      %54 = sbr.rel (0) target = $region21
    $region20: #{tpu_custom_call.1} parent=1 // pred_region
      %s56 = ssub.s32 1024, 1024
      %57 = vsyncadd [#allocation9], %s56
      %s58 = sshll.u32 [#allocation8], 4
      %s59 = int_to_ptr.vmem [resolvable:$true] %s58
      %64 = dma.hbm_to_vmem [thread:$0]  %s4, 1024, %s59, [#allocation9], 64, 64, 4
    $region21: #{tpu_custom_call.1} parent=1 // pred_fallthru
      _
    // Predicated region
    $region22: #{tpu_custom_call.1} parent=1 // pred_check
      _
    $region23: #{tpu_custom_call.1} parent=1 // pred_check_branch
      %66 = sbr.rel (0) target = $region25
    $region24: #{tpu_custom_call.1} parent=1 // pred_region
      _
    $region25: #{tpu_custom_call.1} parent=1 // pred_fallthru
      _
    // Predicated region
    $region26: #{tpu_custom_call.1} parent=1 // pred_check
      _
    $region27: #{tpu_custom_call.1} parent=1 // pred_check_branch
      %68 = sbr.rel (0) target = $region29
    $region28: #{tpu_custom_call.1} parent=1 // pred_region
      %69 = dma.done [#allocation3], 1024
    $region29: #{tpu_custom_call.1} parent=1 // pred_fallthru
      _
    // Predicated region
    $region30: #{tpu_custom_call.1} parent=1 // pred_check
      _
    $region31: #{tpu_custom_call.1} parent=1 // pred_check_branch
      %71 = sbr.rel (0) target = $region33
    $region32: #{tpu_custom_call.1} parent=1 // pred_region
      %72 = dma.done [#allocation6], 1024
    $region33: #{tpu_custom_call.1} parent=1 // pred_fallthru
      _
    // Predicated region
    $region34: #{tpu_custom_call.1} parent=1 // pred_check
      _
    $region35: #{tpu_custom_call.1} parent=1 // pred_check_branch
      %74 = sbr.rel (0) target = $region37
    $region36: #{tpu_custom_call.1} parent=1 // pred_region
      %75 = dma.done [#allocation6], 1024
    $region37: #{tpu_custom_call.1} parent=1 // pred_fallthru
      _
    // Predicated region
    $region38: #{tpu_custom_call.1} parent=1 // pred_check
      _
    $region39: #{tpu_custom_call.1} parent=1 // pred_check_branch
      %77 = sbr.rel (0) target = $region41
    $region40: #{tpu_custom_call.1} parent=1 // pred_region
      %78 = dma.done [#allocation9], 1024
    $region41: #{tpu_custom_call.1} parent=1 // pred_fallthru
      _
    %v80 = vld [vmem:[#allocation5] sm:$0xf]
    %v81 = vld [vmem:[#allocation5 + $0x4] sm:$0xf]
    %v82 = vld [vmem:[#allocation5 + $0x8] sm:$0xf]
    %v83 = vld [vmem:[#allocation5 + $0xc] sm:$0xf]
    %v84 = vld [vmem:[#allocation5 + $0x10] sm:$0xf]
    %v85 = vld [vmem:[#allocation5 + $0x14] sm:$0xf]
    %v86 = vld [vmem:[#allocation5 + $0x18] sm:$0xf]
    %v87 = vld [vmem:[#allocation5 + $0x1c] sm:$0xf]
    %v88 = vld [vmem:[#allocation5 + $0x20] sm:$0xf]
    %v89 = vld [vmem:[#allocation5 + $0x24] sm:$0xf]
    %v90 = vld [vmem:[#allocation5 + $0x28] sm:$0xf]
    %v91 = vld [vmem:[#allocation5 + $0x2c] sm:$0xf]
    %v92 = vld [vmem:[#allocation5 + $0x30] sm:$0xf]
    %v93 = vld [vmem:[#allocation5 + $0x34] sm:$0xf]
    %v94 = vld [vmem:[#allocation5 + $0x38] sm:$0xf]
    %v95 = vld [vmem:[#allocation5 + $0x3c] sm:$0xf]
    %v96 = vld [vmem:[#allocation2] sm:$0xf]
    %v97 = vld [vmem:[#allocation2 + $0x4] sm:$0xf]
    %v98 = vld [vmem:[#allocation2 + $0x8] sm:$0xf]
    %v99 = vld [vmem:[#allocation2 + $0xc] sm:$0xf]
    %v100 = vld [vmem:[#allocation2 + $0x10] sm:$0xf]
    %v101 = vld [vmem:[#allocation2 + $0x14] sm:$0xf]
    %v102 = vld [vmem:[#allocation2 + $0x18] sm:$0xf]
    %v103 = vld [vmem:[#allocation2 + $0x1c] sm:$0xf]
    %v104 = vld [vmem:[#allocation2 + $0x20] sm:$0xf]
    %v105 = vld [vmem:[#allocation2 + $0x24] sm:$0xf]
    %v106 = vld [vmem:[#allocation2 + $0x28] sm:$0xf]
    %v107 = vld [vmem:[#allocation2 + $0x2c] sm:$0xf]
    %v108 = vld [vmem:[#allocation2 + $0x30] sm:$0xf]
    %v109 = vld [vmem:[#allocation2 + $0x34] sm:$0xf]
    %v110 = vld [vmem:[#allocation2 + $0x38] sm:$0xf]
    %v111 = vld [vmem:[#allocation2 + $0x3c] sm:$0xf]
    %v112 = vld [vmem:[#allocation7] sm:$0xf]
    %v113 = vld [vmem:[#allocation7 + $0x4] sm:$0xf]
    %v114 = vld [vmem:[#allocation7 + $0x8] sm:$0xf]
    %v115 = vld [vmem:[#allocation7 + $0xc] sm:$0xf]
    %v116 = vld [vmem:[#allocation7 + $0x10] sm:$0xf]
    %v117 = vld [vmem:[#allocation7 + $0x14] sm:$0xf]
    %v118 = vld [vmem:[#allocation7 + $0x18] sm:$0xf]
    %v119 = vld [vmem:[#allocation7 + $0x1c] sm:$0xf]
    %v120 = vld [vmem:[#allocation7 + $0x20] sm:$0xf]
    %v121 = vld [vmem:[#allocation7 + $0x24] sm:$0xf]
    %v122 = vld [vmem:[#allocation7 + $0x28] sm:$0xf]
    %v123 = vld [vmem:[#allocation7 + $0x2c] sm:$0xf]
    %v124 = vld [vmem:[#allocation7 + $0x30] sm:$0xf]
    %v125 = vld [vmem:[#allocation7 + $0x34] sm:$0xf]
    %v126 = vld [vmem:[#allocation7 + $0x38] sm:$0xf]
    %v127 = vld [vmem:[#allocation7 + $0x3c] sm:$0xf]
    %v144 = vunpack.c.l.b16 %v96
    %v145 = vunpack.c.l.b16 %v97
    %v146 = vunpack.c.l.b16 %v98
    %v147 = vunpack.c.l.b16 %v99
    %v148 = vunpack.c.l.b16 %v100
    %v149 = vunpack.c.l.b16 %v101
    %v150 = vunpack.c.l.b16 %v102
    %v151 = vunpack.c.l.b16 %v103
    %v152 = vunpack.c.l.b16 %v104
    %v153 = vunpack.c.l.b16 %v105
    %v154 = vunpack.c.l.b16 %v106
    %v155 = vunpack.c.l.b16 %v107
    %v156 = vunpack.c.l.b16 %v108
    %v157 = vunpack.c.l.b16 %v109
    %v158 = vunpack.c.l.b16 %v110
    %v159 = vunpack.c.l.b16 %v111
    %v160 = vpack.c.b16 %v145, %v144
    %v161 = vpack.c.b16 %v147, %v146
    %v162 = vpack.c.b16 %v149, %v148
    %v163 = vpack.c.b16 %v151, %v150
    %v164 = vpack.c.b16 %v153, %v152
    %v165 = vpack.c.b16 %v155, %v154
    %v166 = vpack.c.b16 %v157, %v156
    %v167 = vpack.c.b16 %v159, %v158
    %v192 = vunpack.c.l.b16 %v112
    %v193 = vunpack.c.l.b16 %v113
    %v194 = vunpack.c.l.b16 %v114
    %v195 = vunpack.c.l.b16 %v115
    %v196 = vunpack.c.l.b16 %v116
    %v197 = vunpack.c.l.b16 %v117
    %v198 = vunpack.c.l.b16 %v118
    %v199 = vunpack.c.l.b16 %v119
    %v200 = vunpack.c.l.b16 %v120
    %v201 = vunpack.c.l.b16 %v121
    %v202 = vunpack.c.l.b16 %v122
    %v203 = vunpack.c.l.b16 %v123
    %v204 = vunpack.c.l.b16 %v124
    %v205 = vunpack.c.l.b16 %v125
    %v206 = vunpack.c.l.b16 %v126
    %v207 = vunpack.c.l.b16 %v127
    %v208 = vpack.c.b16 %v193, %v192
    %v209 = vpack.c.b16 %v195, %v194
    %v210 = vpack.c.b16 %v197, %v196
    %v211 = vpack.c.b16 %v199, %v198
    %v212 = vpack.c.b16 %v201, %v200
    %v213 = vpack.c.b16 %v203, %v202
    %v214 = vpack.c.b16 %v205, %v204
    %v215 = vpack.c.b16 %v207, %v206
    %224 = vmatprep.subr.bf16.mxu0 0
    %225 = vmatpush1.bf16.msra.mxu0 %v208
    %226 = vmatprep.subr.bf16.mxu0 0
    %227 = vmatpush1.bf16.msra.mxu0 %v209
    %228 = vmatprep.subr.bf16.mxu0 0
    %229 = vmatpush1.bf16.msra.mxu0 %v210
    %230 = vmatprep.subr.bf16.mxu0 0
    %231 = vmatpush1.bf16.msra.mxu0 %v211
    %232 = vmatprep.subr.bf16.mxu0 0
    %233 = vmatpush1.bf16.msra.mxu0 %v212
    %234 = vmatprep.subr.bf16.mxu0 0
    %235 = vmatpush1.bf16.msra.mxu0 %v213
    %236 = vmatprep.subr.bf16.mxu0 0
    %237 = vmatpush1.bf16.msra.mxu0 %v214
    %238 = vmatprep.subr.bf16.mxu0 0
    %239 = vmatpush1.bf16.msra.mxu0 %v215
    %240 = vmatprep.subr.bf16.mxu0 0
    %241 = vmatpush1.bf16.msra.mxu0 0
    %242 = vmatprep.subr.bf16.mxu0 0
    %243 = vmatpush1.bf16.msra.mxu0 0
    %244 = vmatprep.subr.bf16.mxu0 0
    %245 = vmatpush1.bf16.msra.mxu0 0
    %246 = vmatprep.subr.bf16.mxu0 0
    %247 = vmatpush1.bf16.msra.mxu0 0
    %248 = vmatprep.subr.bf16.mxu0 0
    %249 = vmatpush1.bf16.msra.mxu0 0
    %250 = vmatprep.subr.bf16.mxu0 0
    %251 = vmatpush1.bf16.msra.mxu0 0
    %252 = vmatprep.subr.bf16.mxu0 0
    %253 = vmatpush1.bf16.msra.mxu0 0
    %254 = vmatprep.subr.bf16.mxu0 0
    %255 = vmatpush1.bf16.msra.mxu0 0
    %256 = vmatprep.mubr.bf16.mxu0 0
    %257 = vmatmul.mubr.bf16.gmra.mrb[0].mxu0 %v160
    %v258 = vpop.f32.mrb[0].mxu0
    %v259 = vadd.f32 0.0, %v258
    %v260 = vpop.f32.mrb[0].mxu0
    %v261 = vpop.f32.mrb[0].mxu0
    %v262 = vadd.f32 0.0, %v261
    %v263 = vpop.f32.mrb[0].mxu0
    %264 = vmatprep.mubr.bf16.mxu0 0
    %265 = vmatmul.mubr.bf16.gmra.mrb[0].mxu0 %v161
    %v266 = vpop.f32.mrb[0].mxu0
    %v267 = vadd.f32 0.0, %v266
    %v268 = vpop.f32.mrb[0].mxu0
    %v269 = vpop.f32.mrb[0].mxu0
    %v270 = vadd.f32 0.0, %v269
    %v271 = vpop.f32.mrb[0].mxu0
    %272 = vmatprep.mubr.bf16.mxu0 0
    %273 = vmatmul.mubr.bf16.gmra.mrb[0].mxu0 %v162
    %v274 = vpop.f32.mrb[0].mxu0
    %v275 = vadd.f32 0.0, %v274
    %v276 = vpop.f32.mrb[0].mxu0
    %v277 = vpop.f32.mrb[0].mxu0
    %v278 = vadd.f32 0.0, %v277
    %v279 = vpop.f32.mrb[0].mxu0
    %280 = vmatprep.mubr.bf16.mxu0 0
    %281 = vmatmul.mubr.bf16.gmra.mrb[0].mxu0 %v163
    %v282 = vpop.f32.mrb[0].mxu0
    %v283 = vadd.f32 0.0, %v282
    %v284 = vpop.f32.mrb[0].mxu0
    %v285 = vpop.f32.mrb[0].mxu0
    %v286 = vadd.f32 0.0, %v285
    %v287 = vpop.f32.mrb[0].mxu0
    %288 = vmatprep.mubr.bf16.mxu0 0
    %289 = vmatmul.mubr.bf16.gmra.mrb[0].mxu0 %v164
    %v290 = vpop.f32.mrb[0].mxu0
    %v291 = vadd.f32 0.0, %v290
    %v292 = vpop.f32.mrb[0].mxu0
    %v293 = vpop.f32.mrb[0].mxu0
    %v294 = vadd.f32 0.0, %v293
    %v295 = vpop.f32.mrb[0].mxu0
    %296 = vmatprep.mubr.bf16.mxu0 0
    %297 = vmatmul.mubr.bf16.gmra.mrb[0].mxu0 %v165
    %v298 = vpop.f32.mrb[0].mxu0
    %v299 = vadd.f32 0.0, %v298
    %v300 = vpop.f32.mrb[0].mxu0
    %v301 = vpop.f32.mrb[0].mxu0
    %v302 = vadd.f32 0.0, %v301
    %v303 = vpop.f32.mrb[0].mxu0
    %304 = vmatprep.mubr.bf16.mxu0 0
    %305 = vmatmul.mubr.bf16.gmra.mrb[0].mxu0 %v166
    %v306 = vpop.f32.mrb[0].mxu0
    %v307 = vadd.f32 0.0, %v306
    %v308 = vpop.f32.mrb[0].mxu0
    %v309 = vpop.f32.mrb[0].mxu0
    %v310 = vadd.f32 0.0, %v309
    %v311 = vpop.f32.mrb[0].mxu0
    %312 = vmatprep.mubr.bf16.mxu0 0
    %313 = vmatmul.mubr.bf16.gmra.mrb[0].mxu0 %v167
    %v314 = vpop.f32.mrb[0].mxu0
    %v315 = vadd.f32 0.0, %v314
    %v316 = vpop.f32.mrb[0].mxu0
    %v317 = vpop.f32.mrb[0].mxu0
    %v318 = vadd.f32 0.0, %v317
    %v319 = vpop.f32.mrb[0].mxu0
    %320 = vdwg.mxu0
    %v321 = vpack.c.bf16 %v262, %v259
    %v322 = vpack.c.bf16 %v270, %v267
    %v323 = vpack.c.bf16 %v278, %v275
    %v324 = vpack.c.bf16 %v286, %v283
    %v325 = vpack.c.bf16 %v294, %v291
    %v326 = vpack.c.bf16 %v302, %v299
    %v327 = vpack.c.bf16 %v310, %v307
    %v328 = vpack.c.bf16 %v318, %v315
    %v329 = vld [vmem:[%s3] sm:$0x1]
    %v331 = vlaneseq
    %v332 = vshrl.u32 %v331, 7
    %v333 = vsub.s32 0, %v332
    %v334 = vrot.slane %v329, %v333
    %v352 = vunpack.c.l.b16 %v80
    %v353 = vunpack.c.l.b16 %v81
    %v354 = vunpack.c.l.b16 %v82
    %v355 = vunpack.c.l.b16 %v83
    %v356 = vunpack.c.l.b16 %v84
    %v357 = vunpack.c.l.b16 %v85
    %v358 = vunpack.c.l.b16 %v86
    %v359 = vunpack.c.l.b16 %v87
    %v360 = vunpack.c.l.b16 %v88
    %v361 = vunpack.c.l.b16 %v89
    %v362 = vunpack.c.l.b16 %v90
    %v363 = vunpack.c.l.b16 %v91
    %v364 = vunpack.c.l.b16 %v92
    %v365 = vunpack.c.l.b16 %v93
    %v366 = vunpack.c.l.b16 %v94
    %v367 = vunpack.c.l.b16 %v95
    %v368 = vpack.c.b16 %v353, %v352
    %v369 = vpack.c.b16 %v355, %v354
    %v370 = vpack.c.b16 %v357, %v356
    %v371 = vpack.c.b16 %v359, %v358
    %v372 = vpack.c.b16 %v361, %v360
    %v373 = vpack.c.b16 %v363, %v362
    %v374 = vpack.c.b16 %v365, %v364
    %v375 = vpack.c.b16 %v367, %v366
    %384 = vmatprep.subr.bf16.mxu0 0
    %385 = vmatpush1.bf16.msra.mxu0 %v321
    %386 = vmatprep.subr.bf16.mxu0 0
    %387 = vmatpush1.bf16.msra.mxu0 %v322
    %388 = vmatprep.subr.bf16.mxu0 0
    %389 = vmatpush1.bf16.msra.mxu0 %v323
    %390 = vmatprep.subr.bf16.mxu0 0
    %391 = vmatpush1.bf16.msra.mxu0 %v324
    %392 = vmatprep.subr.bf16.mxu0 0
    %393 = vmatpush1.bf16.msra.mxu0 %v325
    %394 = vmatprep.subr.bf16.mxu0 0
    %395 = vmatpush1.bf16.msra.mxu0 %v326
    %396 = vmatprep.subr.bf16.mxu0 0
    %397 = vmatpush1.bf16.msra.mxu0 %v327
    %398 = vmatprep.subr.bf16.mxu0 0
    %399 = vmatpush1.bf16.msra.mxu0 %v328
    %400 = vmatprep.subr.bf16.mxu0 0
    %401 = vmatpush1.bf16.msra.mxu0 0
    %402 = vmatprep.subr.bf16.mxu0 0
    %403 = vmatpush1.bf16.msra.mxu0 0
    %404 = vmatprep.subr.bf16.mxu0 0
    %405 = vmatpush1.bf16.msra.mxu0 0
    %406 = vmatprep.subr.bf16.mxu0 0
    %407 = vmatpush1.bf16.msra.mxu0 0
    %408 = vmatprep.subr.bf16.mxu0 0
    %409 = vmatpush1.bf16.msra.mxu0 0
    %410 = vmatprep.subr.bf16.mxu0 0
    %411 = vmatpush1.bf16.msra.mxu0 0
    %412 = vmatprep.subr.bf16.mxu0 0
    %413 = vmatpush1.bf16.msra.mxu0 0
    %414 = vmatprep.subr.bf16.mxu0 0
    %415 = vmatpush1.bf16.msra.mxu0 0
    %416 = vmatprep.mubr.bf16.mxu0 0
    %417 = vmatmul.mubr.bf16.gmra.mrb[0].mxu0 %v368
    %v418 = vpop.f32.mrb[0].mxu0
    %v419 = vadd.f32 %v334, %v418
    %v420 = vpop.f32.mrb[0].mxu0
    %v421 = vpop.f32.mrb[0].mxu0
    %v422 = vadd.f32 %v334, %v421
    %v423 = vpop.f32.mrb[0].mxu0
    %424 = vmatprep.mubr.bf16.mxu0 0
    %425 = vmatmul.mubr.bf16.gmra.mrb[0].mxu0 %v369
    %v426 = vpop.f32.mrb[0].mxu0
    %v427 = vadd.f32 %v334, %v426
    %v428 = vpop.f32.mrb[0].mxu0
    %v429 = vpop.f32.mrb[0].mxu0
    %v430 = vadd.f32 %v334, %v429
    %v431 = vpop.f32.mrb[0].mxu0
    %432 = vmatprep.mubr.bf16.mxu0 0
    %433 = vmatmul.mubr.bf16.gmra.mrb[0].mxu0 %v370
    %v434 = vpop.f32.mrb[0].mxu0
    %v435 = vadd.f32 %v334, %v434
    %v436 = vpop.f32.mrb[0].mxu0
    %v437 = vpop.f32.mrb[0].mxu0
    %v438 = vadd.f32 %v334, %v437
    %v439 = vpop.f32.mrb[0].mxu0
    %440 = vmatprep.mubr.bf16.mxu0 0
    %441 = vmatmul.mubr.bf16.gmra.mrb[0].mxu0 %v371
    %v442 = vpop.f32.mrb[0].mxu0
    %v443 = vadd.f32 %v334, %v442
    %v444 = vpop.f32.mrb[0].mxu0
    %v445 = vpop.f32.mrb[0].mxu0
    %v446 = vadd.f32 %v334, %v445
    %v447 = vpop.f32.mrb[0].mxu0
    %448 = vmatprep.mubr.bf16.mxu0 0
    %449 = vmatmul.mubr.bf16.gmra.mrb[0].mxu0 %v372
    %v450 = vpop.f32.mrb[0].mxu0
    %v451 = vadd.f32 %v334, %v450
    %v452 = vpop.f32.mrb[0].mxu0
    %v453 = vpop.f32.mrb[0].mxu0
    %v454 = vadd.f32 %v334, %v453
    %v455 = vpop.f32.mrb[0].mxu0
    %456 = vmatprep.mubr.bf16.mxu0 0
    %457 = vmatmul.mubr.bf16.gmra.mrb[0].mxu0 %v373
    %v458 = vpop.f32.mrb[0].mxu0
    %v459 = vadd.f32 %v334, %v458
    %v460 = vpop.f32.mrb[0].mxu0
    %v461 = vpop.f32.mrb[0].mxu0
    %v462 = vadd.f32 %v334, %v461
    %v463 = vpop.f32.mrb[0].mxu0
    %464 = vmatprep.mubr.bf16.mxu0 0
    %465 = vmatmul.mubr.bf16.gmra.mrb[0].mxu0 %v374
    %v466 = vpop.f32.mrb[0].mxu0
    %v467 = vadd.f32 %v334, %v466
    %v468 = vpop.f32.mrb[0].mxu0
    %v469 = vpop.f32.mrb[0].mxu0
    %v470 = vadd.f32 %v334, %v469
    %v471 = vpop.f32.mrb[0].mxu0
    %472 = vmatprep.mubr.bf16.mxu0 0
    %473 = vmatmul.mubr.bf16.gmra.mrb[0].mxu0 %v375
    %v474 = vpop.f32.mrb[0].mxu0
    %v475 = vadd.f32 %v334, %v474
    %v476 = vpop.f32.mrb[0].mxu0
    %v477 = vpop.f32.mrb[0].mxu0
    %v478 = vadd.f32 %v334, %v477
    %v479 = vpop.f32.mrb[0].mxu0
    %480 = vdwg.mxu0
    %v481 = vmax.f32 %v419, 0.0
    %v482 = vmax.f32 %v422, 0.0
    %v483 = vmax.f32 %v427, 0.0
    %v484 = vmax.f32 %v430, 0.0
    %v485 = vmax.f32 %v435, 0.0
    %v486 = vmax.f32 %v438, 0.0
    %v487 = vmax.f32 %v443, 0.0
    %v488 = vmax.f32 %v446, 0.0
    %v489 = vmax.f32 %v451, 0.0
    %v490 = vmax.f32 %v454, 0.0
    %v491 = vmax.f32 %v459, 0.0
    %v492 = vmax.f32 %v462, 0.0
    %v493 = vmax.f32 %v467, 0.0
    %v494 = vmax.f32 %v470, 0.0
    %v495 = vmax.f32 %v475, 0.0
    %v496 = vmax.f32 %v478, 0.0
    %v497 = vpack.c.bf16 %v482, %v481
    %v498 = vpack.c.bf16 %v484, %v483
    %v499 = vpack.c.bf16 %v486, %v485
    %v500 = vpack.c.bf16 %v488, %v487
    %v501 = vpack.c.bf16 %v490, %v489
    %v502 = vpack.c.bf16 %v492, %v491
    %v503 = vpack.c.bf16 %v494, %v493
    %v504 = vpack.c.bf16 %v496, %v495
    %v505 = vld [vmem:[#allocation8] sm:$0xf]
    %v506 = vld [vmem:[#allocation8 + $0x4] sm:$0xf]
    %v507 = vld [vmem:[#allocation8 + $0x8] sm:$0xf]
    %v508 = vld [vmem:[#allocation8 + $0xc] sm:$0xf]
    %v509 = vld [vmem:[#allocation8 + $0x10] sm:$0xf]
    %v510 = vld [vmem:[#allocation8 + $0x14] sm:$0xf]
    %v511 = vld [vmem:[#allocation8 + $0x18] sm:$0xf]
    %v512 = vld [vmem:[#allocation8 + $0x1c] sm:$0xf]
    %v513 = vld [vmem:[#allocation8 + $0x20] sm:$0xf]
    %v514 = vld [vmem:[#allocation8 + $0x24] sm:$0xf]
    %v515 = vld [vmem:[#allocation8 + $0x28] sm:$0xf]
    %v516 = vld [vmem:[#allocation8 + $0x2c] sm:$0xf]
    %v517 = vld [vmem:[#allocation8 + $0x30] sm:$0xf]
    %v518 = vld [vmem:[#allocation8 + $0x34] sm:$0xf]
    %v519 = vld [vmem:[#allocation8 + $0x38] sm:$0xf]
    %v520 = vld [vmem:[#allocation8 + $0x3c] sm:$0xf]
    %v537 = vunpack.c.l.b16 %v505
    %v538 = vunpack.c.l.b16 %v506
    %v539 = vunpack.c.l.b16 %v507
    %v540 = vunpack.c.l.b16 %v508
    %v541 = vunpack.c.l.b16 %v509
    %v542 = vunpack.c.l.b16 %v510
    %v543 = vunpack.c.l.b16 %v511
    %v544 = vunpack.c.l.b16 %v512
    %v545 = vunpack.c.l.b16 %v513
    %v546 = vunpack.c.l.b16 %v514
    %v547 = vunpack.c.l.b16 %v515
    %v548 = vunpack.c.l.b16 %v516
    %v549 = vunpack.c.l.b16 %v517
    %v550 = vunpack.c.l.b16 %v518
    %v551 = vunpack.c.l.b16 %v519
    %v552 = vunpack.c.l.b16 %v520
    %v553 = vpack.c.b16 %v538, %v537
    %v554 = vpack.c.b16 %v540, %v539
    %v555 = vpack.c.b16 %v542, %v541
    %v556 = vpack.c.b16 %v544, %v543
    %v557 = vpack.c.b16 %v546, %v545
    %v558 = vpack.c.b16 %v548, %v547
    %v559 = vpack.c.b16 %v550, %v549
    %v560 = vpack.c.b16 %v552, %v551
    %569 = vmatprep.subr.bf16.mxu0 0
    %570 = vmatpush1.bf16.msra.mxu0 %v553
    %571 = vmatprep.subr.bf16.mxu0 0
    %572 = vmatpush1.bf16.msra.mxu0 %v554
    %573 = vmatprep.subr.bf16.mxu0 0
    %574 = vmatpush1.bf16.msra.mxu0 %v555
    %575 = vmatprep.subr.bf16.mxu0 0
    %576 = vmatpush1.bf16.msra.mxu0 %v556
    %577 = vmatprep.subr.bf16.mxu0 0
    %578 = vmatpush1.bf16.msra.mxu0 %v557
    %579 = vmatprep.subr.bf16.mxu0 0
    %580 = vmatpush1.bf16.msra.mxu0 %v558
    %581 = vmatprep.subr.bf16.mxu0 0
    %582 = vmatpush1.bf16.msra.mxu0 %v559
    %583 = vmatprep.subr.bf16.mxu0 0
    %584 = vmatpush1.bf16.msra.mxu0 %v560
    %585 = vmatprep.subr.bf16.mxu0 0
    %586 = vmatpush1.bf16.msra.mxu0 0
    %587 = vmatprep.subr.bf16.mxu0 0
    %588 = vmatpush1.bf16.msra.mxu0 0
    %589 = vmatprep.subr.bf16.mxu0 0
    %590 = vmatpush1.bf16.msra.mxu0 0
    %591 = vmatprep.subr.bf16.mxu0 0
    %592 = vmatpush1.bf16.msra.mxu0 0
    %593 = vmatprep.subr.bf16.mxu0 0
    %594 = vmatpush1.bf16.msra.mxu0 0
    %595 = vmatprep.subr.bf16.mxu0 0
    %596 = vmatpush1.bf16.msra.mxu0 0
    %597 = vmatprep.subr.bf16.mxu0 0
    %598 = vmatpush1.bf16.msra.mxu0 0
    %599 = vmatprep.subr.bf16.mxu0 0
    %600 = vmatpush1.bf16.msra.mxu0 0
    %601 = vmatprep.mubr.bf16.mxu0 0
    %602 = vmatmul.mubr.bf16.gmra.mrb[0].mxu0 %v497
    %v603 = vpop.f32.mrb[0].mxu0
    %v604 = vadd.f32 0.0, %v603
    %v605 = vpop.f32.mrb[0].mxu0
    %v606 = vpop.f32.mrb[0].mxu0
    %v607 = vadd.f32 0.0, %v606
    %v608 = vpop.f32.mrb[0].mxu0
    %609 = vmatprep.mubr.bf16.mxu0 0
    %610 = vmatmul.mubr.bf16.gmra.mrb[0].mxu0 %v498
    %v611 = vpop.f32.mrb[0].mxu0
    %v612 = vadd.f32 0.0, %v611
    %v613 = vpop.f32.mrb[0].mxu0
    %v614 = vpop.f32.mrb[0].mxu0
    %v615 = vadd.f32 0.0, %v614
    %v616 = vpop.f32.mrb[0].mxu0
    %617 = vmatprep.mubr.bf16.mxu0 0
    %618 = vmatmul.mubr.bf16.gmra.mrb[0].mxu0 %v499
    %v619 = vpop.f32.mrb[0].mxu0
    %v620 = vadd.f32 0.0, %v619
    %v621 = vpop.f32.mrb[0].mxu0
    %v622 = vpop.f32.mrb[0].mxu0
    %v623 = vadd.f32 0.0, %v622
    %v624 = vpop.f32.mrb[0].mxu0
    %625 = vmatprep.mubr.bf16.mxu0 0
    %626 = vmatmul.mubr.bf16.gmra.mrb[0].mxu0 %v500
    %v627 = vpop.f32.mrb[0].mxu0
    %v628 = vadd.f32 0.0, %v627
    %v629 = vpop.f32.mrb[0].mxu0
    %v630 = vpop.f32.mrb[0].mxu0
    %v631 = vadd.f32 0.0, %v630
    %v632 = vpop.f32.mrb[0].mxu0
    %633 = vmatprep.mubr.bf16.mxu0 0
    %634 = vmatmul.mubr.bf16.gmra.mrb[0].mxu0 %v501
    %v635 = vpop.f32.mrb[0].mxu0
    %v636 = vadd.f32 0.0, %v635
    %v637 = vpop.f32.mrb[0].mxu0
    %v638 = vpop.f32.mrb[0].mxu0
    %v639 = vadd.f32 0.0, %v638
    %v640 = vpop.f32.mrb[0].mxu0
    %641 = vmatprep.mubr.bf16.mxu0 0
    %642 = vmatmul.mubr.bf16.gmra.mrb[0].mxu0 %v502
    %v643 = vpop.f32.mrb[0].mxu0
    %v644 = vadd.f32 0.0, %v643
    %v645 = vpop.f32.mrb[0].mxu0
    %v646 = vpop.f32.mrb[0].mxu0
    %v647 = vadd.f32 0.0, %v646
    %v648 = vpop.f32.mrb[0].mxu0
    %649 = vmatprep.mubr.bf16.mxu0 0
    %650 = vmatmul.mubr.bf16.gmra.mrb[0].mxu0 %v503
    %v651 = vpop.f32.mrb[0].mxu0
    %v652 = vadd.f32 0.0, %v651
    %v653 = vpop.f32.mrb[0].mxu0
    %v654 = vpop.f32.mrb[0].mxu0
    %v655 = vadd.f32 0.0, %v654
    %v656 = vpop.f32.mrb[0].mxu0
    %657 = vmatprep.mubr.bf16.mxu0 0
    %658 = vmatmul.mubr.bf16.gmra.mrb[0].mxu0 %v504
    %v659 = vpop.f32.mrb[0].mxu0
    %v660 = vadd.f32 0.0, %v659
    %v661 = vpop.f32.mrb[0].mxu0
    %v662 = vpop.f32.mrb[0].mxu0
    %v663 = vadd.f32 0.0, %v662
    %v664 = vpop.f32.mrb[0].mxu0
    %665 = vdwg.mxu0
    %v666 = vpack.c.bf16 %v607, %v604
    %v667 = vpack.c.bf16 %v615, %v612
    %v668 = vpack.c.bf16 %v623, %v620
    %v669 = vpack.c.bf16 %v631, %v628
    %v670 = vpack.c.bf16 %v639, %v636
    %v671 = vpack.c.bf16 %v647, %v644
    %v672 = vpack.c.bf16 %v655, %v652
    %v673 = vpack.c.bf16 %v663, %v660
    %v674 = vld [vmem:[%s5] sm:$0x1]
    %v676 = vlaneseq
    %v677 = vshrl.u32 %v676, 7
    %v678 = vsub.s32 0, %v677
    %v679 = vrot.slane %v674, %v678
    %681 = vmatprep.subr.bf16.mxu0 0
    %682 = vmatpush1.bf16.msra.mxu0 %v666
    %683 = vmatprep.subr.bf16.mxu0 0
    %684 = vmatpush1.bf16.msra.mxu0 %v667
    %685 = vmatprep.subr.bf16.mxu0 0
    %686 = vmatpush1.bf16.msra.mxu0 %v668
    %687 = vmatprep.subr.bf16.mxu0 0
    %688 = vmatpush1.bf16.msra.mxu0 %v669
    %689 = vmatprep.subr.bf16.mxu0 0
    %690 = vmatpush1.bf16.msra.mxu0 %v670
    %691 = vmatprep.subr.bf16.mxu0 0
    %692 = vmatpush1.bf16.msra.mxu0 %v671
    %693 = vmatprep.subr.bf16.mxu0 0
    %694 = vmatpush1.bf16.msra.mxu0 %v672
    %695 = vmatprep.subr.bf16.mxu0 0
    %696 = vmatpush1.bf16.msra.mxu0 %v673
    %697 = vmatprep.subr.bf16.mxu0 0
    %698 = vmatpush1.bf16.msra.mxu0 0
    %699 = vmatprep.subr.bf16.mxu0 0
    %700 = vmatpush1.bf16.msra.mxu0 0
    %701 = vmatprep.subr.bf16.mxu0 0
    %702 = vmatpush1.bf16.msra.mxu0 0
    %703 = vmatprep.subr.bf16.mxu0 0
    %704 = vmatpush1.bf16.msra.mxu0 0
    %705 = vmatprep.subr.bf16.mxu0 0
    %706 = vmatpush1.bf16.msra.mxu0 0
    %707 = vmatprep.subr.bf16.mxu0 0
    %708 = vmatpush1.bf16.msra.mxu0 0
    %709 = vmatprep.subr.bf16.mxu0 0
    %710 = vmatpush1.bf16.msra.mxu0 0
    %711 = vmatprep.subr.bf16.mxu0 0
    %712 = vmatpush1.bf16.msra.mxu0 0
    %713 = vmatprep.mubr.bf16.mxu0 0
    %714 = vmatmul.mubr.bf16.gmra.mrb[0].mxu0 %v368
    %v715 = vpop.f32.mrb[0].mxu0
    %v716 = vadd.f32 %v679, %v715
    %v717 = vpop.f32.mrb[0].mxu0
    %v718 = vpop.f32.mrb[0].mxu0
    %v719 = vadd.f32 %v679, %v718
    %v720 = vpop.f32.mrb[0].mxu0
    %721 = vmatprep.mubr.bf16.mxu0 0
    %722 = vmatmul.mubr.bf16.gmra.mrb[0].mxu0 %v369
    %v723 = vpop.f32.mrb[0].mxu0
    %v724 = vadd.f32 %v679, %v723
    %v725 = vpop.f32.mrb[0].mxu0
    %v726 = vpop.f32.mrb[0].mxu0
    %v727 = vadd.f32 %v679, %v726
    %v728 = vpop.f32.mrb[0].mxu0
    %729 = vmatprep.mubr.bf16.mxu0 0
    %730 = vmatmul.mubr.bf16.gmra.mrb[0].mxu0 %v370
    %v731 = vpop.f32.mrb[0].mxu0
    %v732 = vadd.f32 %v679, %v731
    %v733 = vpop.f32.mrb[0].mxu0
    %v734 = vpop.f32.mrb[0].mxu0
    %v735 = vadd.f32 %v679, %v734
    %v736 = vpop.f32.mrb[0].mxu0
    %737 = vmatprep.mubr.bf16.mxu0 0
    %738 = vmatmul.mubr.bf16.gmra.mrb[0].mxu0 %v371
    %v739 = vpop.f32.mrb[0].mxu0
    %v740 = vadd.f32 %v679, %v739
    %v741 = vpop.f32.mrb[0].mxu0
    %v742 = vpop.f32.mrb[0].mxu0
    %v743 = vadd.f32 %v679, %v742
    %v744 = vpop.f32.mrb[0].mxu0
    %745 = vmatprep.mubr.bf16.mxu0 0
    %746 = vmatmul.mubr.bf16.gmra.mrb[0].mxu0 %v372
    %v747 = vpop.f32.mrb[0].mxu0
    %v748 = vadd.f32 %v679, %v747
    %v749 = vpop.f32.mrb[0].mxu0
    %v750 = vpop.f32.mrb[0].mxu0
    %v751 = vadd.f32 %v679, %v750
    %v752 = vpop.f32.mrb[0].mxu0
    %753 = vmatprep.mubr.bf16.mxu0 0
    %754 = vmatmul.mubr.bf16.gmra.mrb[0].mxu0 %v373
    %v755 = vpop.f32.mrb[0].mxu0
    %v756 = vadd.f32 %v679, %v755
    %v757 = vpop.f32.mrb[0].mxu0
    %v758 = vpop.f32.mrb[0].mxu0
    %v759 = vadd.f32 %v679, %v758
    %v760 = vpop.f32.mrb[0].mxu0
    %761 = vmatprep.mubr.bf16.mxu0 0
    %762 = vmatmul.mubr.bf16.gmra.mrb[0].mxu0 %v374
    %v763 = vpop.f32.mrb[0].mxu0
    %v764 = vadd.f32 %v679, %v763
    %v765 = vpop.f32.mrb[0].mxu0
    %v766 = vpop.f32.mrb[0].mxu0
    %v767 = vadd.f32 %v679, %v766
    %v768 = vpop.f32.mrb[0].mxu0
    %769 = vmatprep.mubr.bf16.mxu0 0
    %770 = vmatmul.mubr.bf16.gmra.mrb[0].mxu0 %v375
    %v771 = vpop.f32.mrb[0].mxu0
    %v772 = vadd.f32 %v679, %v771
    %v773 = vpop.f32.mrb[0].mxu0
    %v774 = vpop.f32.mrb[0].mxu0
    %v775 = vadd.f32 %v679, %v774
    %v776 = vpop.f32.mrb[0].mxu0
    %777 = vdwg.mxu0
    %v778 = vlaneseq
    %v779 = vand.u32 %v778, 127
    %vm780 = vcmp.lt.s32.totalorder %v779, 7
    %v781 = vsel %vm780, %v716, -inf
    %v782 = vsel %vm780, %v719, -inf
    %v783 = vsel %vm780, %v724, -inf
    %v784 = vsel %vm780, %v727, -inf
    %v785 = vsel %vm780, %v732, -inf
    %v786 = vsel %vm780, %v735, -inf
    %v787 = vsel %vm780, %v740, -inf
    %v788 = vsel %vm780, %v743, -inf
    %v789 = vsel %vm780, %v748, -inf
    %v790 = vsel %vm780, %v751, -inf
    %v791 = vsel %vm780, %v756, -inf
    %v792 = vsel %vm780, %v759, -inf
    %v793 = vsel %vm780, %v764, -inf
    %v794 = vsel %vm780, %v767, -inf
    %v795 = vsel %vm780, %v772, -inf
    %v796 = vsel %vm780, %v775, -inf
    %797 = vmax.xlane.f32.xlu0 %v781
    %v798 = vpop.xlane.xlu0 %797
    %799 = vmax.xlane.f32.xlu0 %v782
    %v800 = vpop.xlane.xlu0 %799
    %801 = vmax.xlane.f32.xlu0 %v783
    %v802 = vpop.xlane.xlu0 %801
    %803 = vmax.xlane.f32.xlu0 %v784
    %v804 = vpop.xlane.xlu0 %803
    %805 = vmax.xlane.f32.xlu0 %v785
    %v806 = vpop.xlane.xlu0 %805
    %807 = vmax.xlane.f32.xlu0 %v786
    %v808 = vpop.xlane.xlu0 %807
    %809 = vmax.xlane.f32.xlu0 %v787
    %v810 = vpop.xlane.xlu0 %809
    %811 = vmax.xlane.f32.xlu0 %v788
    %v812 = vpop.xlane.xlu0 %811
    %813 = vmax.xlane.f32.xlu0 %v789
    %v814 = vpop.xlane.xlu0 %813
    %815 = vmax.xlane.f32.xlu0 %v790
    %v816 = vpop.xlane.xlu0 %815
    %817 = vmax.xlane.f32.xlu0 %v791
    %v818 = vpop.xlane.xlu0 %817
    %819 = vmax.xlane.f32.xlu0 %v792
    %v820 = vpop.xlane.xlu0 %819
    %821 = vmax.xlane.f32.xlu0 %v793
    %v822 = vpop.xlane.xlu0 %821
    %823 = vmax.xlane.f32.xlu0 %v794
    %v824 = vpop.xlane.xlu0 %823
    %825 = vmax.xlane.f32.xlu0 %v795
    %v826 = vpop.xlane.xlu0 %825
    %827 = vmax.xlane.f32.xlu0 %v796
    %v828 = vpop.xlane.xlu0 %827
    %v829 = vsub.f32 %v781, %v798
    %v830 = vsub.f32 %v782, %v800
    %v831 = vsub.f32 %v783, %v802
    %v832 = vsub.f32 %v784, %v804
    %v833 = vsub.f32 %v785, %v806
    %v834 = vsub.f32 %v786, %v808
    %v835 = vsub.f32 %v787, %v810
    %v836 = vsub.f32 %v788, %v812
    %v837 = vsub.f32 %v789, %v814
    %v838 = vsub.f32 %v790, %v816
    %v839 = vsub.f32 %v791, %v818
    %v840 = vsub.f32 %v792, %v820
    %v841 = vsub.f32 %v793, %v822
    %v842 = vsub.f32 %v794, %v824
    %v843 = vsub.f32 %v795, %v826
    %v844 = vsub.f32 %v796, %v828
    %v845 = vmul.f32 %v829, 1.442695
    %v846 = vpow.pop %v845
    %v847 = vmul.f32 %v830, 1.442695
    %v848 = vpow.pop %v847
    %v849 = vmul.f32 %v831, 1.442695
    %v850 = vpow.pop %v849
    %v851 = vmul.f32 %v832, 1.442695
    %v852 = vpow.pop %v851
    %v853 = vmul.f32 %v833, 1.442695
    %v854 = vpow.pop %v853
    %v855 = vmul.f32 %v834, 1.442695
    %v856 = vpow.pop %v855
    %v857 = vmul.f32 %v835, 1.442695
    %v858 = vpow.pop %v857
    %v859 = vmul.f32 %v836, 1.442695
    %v860 = vpow.pop %v859
    %v861 = vmul.f32 %v837, 1.442695
    %v862 = vpow.pop %v861
    %v863 = vmul.f32 %v838, 1.442695
    %v864 = vpow.pop %v863
    %v865 = vmul.f32 %v839, 1.442695
    %v866 = vpow.pop %v865
    %v867 = vmul.f32 %v840, 1.442695
    %v868 = vpow.pop %v867
    %v869 = vmul.f32 %v841, 1.442695
    %v870 = vpow.pop %v869
    %v871 = vmul.f32 %v842, 1.442695
    %v872 = vpow.pop %v871
    %v873 = vmul.f32 %v843, 1.442695
    %v874 = vpow.pop %v873
    %v875 = vmul.f32 %v844, 1.442695
    %v876 = vpow.pop %v875
    %v877 = vsel %vm780, %v846, 0.0
    %v878 = vsel %vm780, %v848, 0.0
    %v879 = vsel %vm780, %v850, 0.0
    %v880 = vsel %vm780, %v852, 0.0
    %v881 = vsel %vm780, %v854, 0.0
    %v882 = vsel %vm780, %v856, 0.0
    %v883 = vsel %vm780, %v858, 0.0
    %v884 = vsel %vm780, %v860, 0.0
    %v885 = vsel %vm780, %v862, 0.0
    %v886 = vsel %vm780, %v864, 0.0
    %v887 = vsel %vm780, %v866, 0.0
    %v888 = vsel %vm780, %v868, 0.0
    %v889 = vsel %vm780, %v870, 0.0
    %v890 = vsel %vm780, %v872, 0.0
    %v891 = vsel %vm780, %v874, 0.0
    %v892 = vsel %vm780, %v876, 0.0
    %893 = vadd.xlane.f32.xlu0 %v877
    %v894 = vpop.xlane.xlu0 %893
    %895 = vadd.xlane.f32.xlu0 %v878
    %v896 = vpop.xlane.xlu0 %895
    %897 = vadd.xlane.f32.xlu0 %v879
    %v898 = vpop.xlane.xlu0 %897
    %899 = vadd.xlane.f32.xlu0 %v880
    %v900 = vpop.xlane.xlu0 %899
    %901 = vadd.xlane.f32.xlu0 %v881
    %v902 = vpop.xlane.xlu0 %901
    %903 = vadd.xlane.f32.xlu0 %v882
    %v904 = vpop.xlane.xlu0 %903
    %905 = vadd.xlane.f32.xlu0 %v883
    %v906 = vpop.xlane.xlu0 %905
    %907 = vadd.xlane.f32.xlu0 %v884
    %v908 = vpop.xlane.xlu0 %907
    %909 = vadd.xlane.f32.xlu0 %v885
    %v910 = vpop.xlane.xlu0 %909
    %911 = vadd.xlane.f32.xlu0 %v886
    %v912 = vpop.xlane.xlu0 %911
    %913 = vadd.xlane.f32.xlu0 %v887
    %v914 = vpop.xlane.xlu0 %913
    %915 = vadd.xlane.f32.xlu0 %v888
    %v916 = vpop.xlane.xlu0 %915
    %917 = vadd.xlane.f32.xlu0 %v889
    %v918 = vpop.xlane.xlu0 %917
    %919 = vadd.xlane.f32.xlu0 %v890
    %v920 = vpop.xlane.xlu0 %919
    %921 = vadd.xlane.f32.xlu0 %v891
    %v922 = vpop.xlane.xlu0 %921
    %923 = vadd.xlane.f32.xlu0 %v892
    %v924 = vpop.xlane.xlu0 %923
    %v925 = vlog2.pop %v894
    %v926 = vmul.f32 %v925, 0.6931472
    %v927 = vlog2.pop %v896
    %v928 = vmul.f32 %v927, 0.6931472
    %v929 = vlog2.pop %v898
    %v930 = vmul.f32 %v929, 0.6931472
    %v931 = vlog2.pop %v900
    %v932 = vmul.f32 %v931, 0.6931472
    %v933 = vlog2.pop %v902
    %v934 = vmul.f32 %v933, 0.6931472
    %v935 = vlog2.pop %v904
    %v936 = vmul.f32 %v935, 0.6931472
    %v937 = vlog2.pop %v906
    %v938 = vmul.f32 %v937, 0.6931472
    %v939 = vlog2.pop %v908
    %v940 = vmul.f32 %v939, 0.6931472
    %v941 = vlog2.pop %v910
    %v942 = vmul.f32 %v941, 0.6931472
    %v943 = vlog2.pop %v912
    %v944 = vmul.f32 %v943, 0.6931472
    %v945 = vlog2.pop %v914
    %v946 = vmul.f32 %v945, 0.6931472
    %v947 = vlog2.pop %v916
    %v948 = vmul.f32 %v947, 0.6931472
    %v949 = vlog2.pop %v918
    %v950 = vmul.f32 %v949, 0.6931472
    %v951 = vlog2.pop %v920
    %v952 = vmul.f32 %v951, 0.6931472
    %v953 = vlog2.pop %v922
    %v954 = vmul.f32 %v953, 0.6931472
    %v955 = vlog2.pop %v924
    %v956 = vmul.f32 %v955, 0.6931472
    %v957 = vsub.f32 %v829, %v926
    %v958 = vsub.f32 %v830, %v928
    %v959 = vsub.f32 %v831, %v930
    %v960 = vsub.f32 %v832, %v932
    %v961 = vsub.f32 %v833, %v934
    %v962 = vsub.f32 %v834, %v936
    %v963 = vsub.f32 %v835, %v938
    %v964 = vsub.f32 %v836, %v940
    %v965 = vsub.f32 %v837, %v942
    %v966 = vsub.f32 %v838, %v944
    %v967 = vsub.f32 %v839, %v946
    %v968 = vsub.f32 %v840, %v948
    %v969 = vsub.f32 %v841, %v950
    %v970 = vsub.f32 %v842, %v952
    %v971 = vsub.f32 %v843, %v954
    %v972 = vsub.f32 %v844, %v956
    %973 = vst [vmem:[#allocation10] sm:$0xff] %v957
    %974 = vst [vmem:[#allocation10 + $0x8] sm:$0xff] %v958
    %975 = vst [vmem:[#allocation10 + $0x10] sm:$0xff] %v959
    %976 = vst [vmem:[#allocation10 + $0x18] sm:$0xff] %v960
    %977 = vst [vmem:[#allocation10 + $0x20] sm:$0xff] %v961
    %978 = vst [vmem:[#allocation10 + $0x28] sm:$0xff] %v962
    %979 = vst [vmem:[#allocation10 + $0x30] sm:$0xff] %v963
    %980 = vst [vmem:[#allocation10 + $0x38] sm:$0xff] %v964
    %981 = vst [vmem:[#allocation10 + $0x40] sm:$0xff] %v965
    %982 = vst [vmem:[#allocation10 + $0x48] sm:$0xff] %v966
    %983 = vst [vmem:[#allocation10 + $0x50] sm:$0xff] %v967
    %984 = vst [vmem:[#allocation10 + $0x58] sm:$0xff] %v968
    %985 = vst [vmem:[#allocation10 + $0x60] sm:$0xff] %v969
    %986 = vst [vmem:[#allocation10 + $0x68] sm:$0xff] %v970
    %987 = vst [vmem:[#allocation10 + $0x70] sm:$0xff] %v971
    %988 = vst [vmem:[#allocation10 + $0x78] sm:$0xff] %v972
    // Predicated region
    $region42: #{tpu_custom_call.1} parent=1 // pred_check
      _
    $region43: #{tpu_custom_call.1} parent=1 // pred_check_branch
      %990 = sbr.rel (0) target = $region45
    $region44: #{tpu_custom_call.1} parent=1 // pred_region
      %s992 = ssub.s32 2048, 2048
      %993 = vsyncadd [#allocation4], %s992
      %s994 = sshll.u32 [#allocation10], 4
      %s995 = int_to_ptr.vmem [resolvable:$true] %s994
      %1000 = dma.vmem_to_hbm [thread:$0]  %s995, 2048, %s6, [#allocation4], 128, 128, 8
    $region45: #{tpu_custom_call.1} parent=1 // pred_fallthru
      _
    // Predicated region
    $region46: #{tpu_custom_call.1} parent=1 // pred_check
      _
    $region47: #{tpu_custom_call.1} parent=1 // pred_check_branch
      %1002 = sbr.rel (0) target = $region49
    $region48: #{tpu_custom_call.1} parent=1 // pred_region
      %1003 = dma.done [#allocation4], 2048
    $region49: #{tpu_custom_call.1} parent=1 // pred_fallthru
      _
    %1004 = vsyncpa [#allocation3], 1
    %1005 = vsyncpa [#allocation6], 1
    %1006 = vsyncpa [#allocation9], 1
    %1007 = vsyncpa [#allocation4], 1

</llo_original>
